<compile_context>
chip_gen: v7x
topology: tpu7x:2x2x1
jax: 0.10.0
libtpu: 0.0.40
codegen_flags: <defaults>
</compile_context>

<pallas_src>
import jax
import jax.numpy as jnp
from jax.experimental import pallas as pl
from jax.experimental.pallas import tpu as pltpu


def _swish_kernel(sp_ref, x_ref, o_ref):
    # sp_ref: precomputed softplus(beta) scalar in SMEM (scalar path, no
    # per-tile broadcast load).
    sp = sp_ref[0]
    xv = x_ref[...].astype(jnp.float32)
    # x * sigmoid(x * softplus(beta)) / 1.1 -- VPU muls + one EUP sigmoid.
    y = (xv * jax.nn.sigmoid(xv * sp)) * (1.0 / 1.1)
    o_ref[...] = y.astype(o_ref.dtype)


def _choose_slab(total, itemsize, target_block_bytes):
    """Pick (rows, lanes, block_rows, padded_total) for a lane-dense 2D slab."""
    # Widest lane count that divides the flat size exactly (no padding, wide
    # unmasked vst's). Fall back to 128 + padding only for ragged sizes.
    lanes = None
    for cand in (2048, 1024, 512, 256, 128):
        if total % cand == 0:
            lanes = cand
            break
    if lanes is None:
        lanes = 128
    rows = pl.cdiv(total, lanes)
    padded = rows * lanes

    if rows <= 8:
        # Single full-height block (block dims == full array dims is allowed).
        block_rows = rows
        return rows, lanes, block_rows, padded

    # Aim for ~target_block_bytes per tile, multiple of 8 sublanes.
    desired = max(8, (target_block_bytes // (lanes * itemsize)) // 8 * 8)
    if rows >= 16:
        # v7x megacore: guarantee >= 2 grid steps so both TensorCores stream.
        desired = min(desired, max(8, (rows // 2) // 8 * 8))
    block_rows = min(desired, (rows // 8) * 8)

    # Prefer an even number of grid steps (balanced 2-core sharding on v7x).
    steps = pl.cdiv(rows, block_rows)
    if steps % 2 == 1 and 1 < steps <= 64:
        for cand_br in range(block_rows - 8, 7, -8):
            new_steps = pl.cdiv(rows, cand_br)
            if new_steps % 2 == 0:
                block_rows = cand_br
                break
            if new_steps > 2 * steps:
                break  # would shrink blocks too much; keep the odd count
    return rows, lanes, block_rows, padded


def swish_pallas(x, beta, *, target_block_bytes=2 * 1024 * 1024):
    """x: any shape. beta: (1,). Returns same shape/dtype as x."""
    orig_shape = x.shape
    orig_dtype = x.dtype
    total = x.size
    itemsize = jnp.dtype(orig_dtype).itemsize

    # Hoisted, numerically-stable softplus(beta): computed once in the wrapper.
    b = beta[0].astype(jnp.float32)
    sp = jnp.where(b > 0, b + jnp.log1p(jnp.exp(-b)), jnp.log1p(jnp.exp(b)))
    sp = jnp.reshape(sp, (1,)).astype(jnp.float32)

    rows, lanes, block_rows, padded = _choose_slab(total, itemsize,
                                                   target_block_bytes)

    x_flat = jnp.reshape(x, (total,))
    if padded != total:
        # Only for ragged sizes (total % 128 != 0); typical activation sizes
        # tile cleanly and never take this branch.
        # TODO(synk): replace with an in-kernel masked tail if ragged sizes
        # ever show up on the hot path.
        x_flat = jnp.pad(x_flat, (0, padded - total))
    x2d = jnp.reshape(x_flat, (rows, lanes))

    grid = (pl.cdiv(rows, block_rows),)

    out2d = pl.pallas_call(
        _swish_kernel,
        out_shape=jax.ShapeDtypeStruct((rows, lanes), orig_dtype),
        grid_spec=pltpu.PrefetchScalarGridSpec(
            num_scalar_prefetch=0,
            grid=grid,
            in_specs=[
                pl.BlockSpec(memory_space=pltpu.MemorySpace.SMEM),  # softplus(beta)
                pl.BlockSpec((block_rows, lanes), lambda i: (i, 0)),
            ],
            out_specs=pl.BlockSpec((block_rows, lanes), lambda i: (i, 0)),
        ),
        input_output_aliases={1: 0},  # donate x buffer to the output
        compiler_params=pltpu.CompilerParams(
            dimension_semantics=("parallel",),
        ),
    )(sp, x2d)

    out_flat = jnp.reshape(out2d, (padded,))
    if padded != total:
        out_flat = out_flat[:total]
    return jnp.reshape(out_flat, orig_shape)


def swish_reference(x, beta):
    b = beta[0].astype(jnp.float32)
    sp = jnp.where(b > 0, b + jnp.log1p(jnp.exp(-b)), jnp.log1p(jnp.exp(b)))
    return ((x * jax.nn.sigmoid(x * sp)) / 1.1).astype(x.dtype)


if __name__ == "__main__":
    key = jax.random.PRNGKey(0)
    # Small NCHW activation consistent with the module's usage.
    x = jax.random.normal(key, (2, 4, 16, 16), dtype=jnp.float32)
    # Deterministic parameter init, matching nn.Parameter(torch.tensor([0.5])).
    beta = jnp.array([0.5], dtype=jnp.float32)

    y = swish_pallas(x, beta)
    y = jax.block_until_ready(y)

    y_ref = swish_reference(x, beta)
    assert y.shape == x.shape and y.dtype == x.dtype
    assert jnp.allclose(y, y_ref, atol=1e-5, rtol=1e-5)

    print("KERNEL_OK")
</pallas_src>

<mosaic_0001>
module attributes {stable_mosaic.version = 11 : i64} {
  func.func @_swish_kernel(%arg0: i32, %arg1: memref<1xf32, #tpu.memory_space<smem>>, %arg2: memref<1x2048xf32, #tpu.memory_space<vmem>>, %arg3: memref<1x2048xf32, #tpu.memory_space<vmem>>) attributes {dimension_semantics = [#tpu.dimension_semantics<parallel>], iteration_bounds = array<i64: 1>, scalar_prefetch = 0 : i64, scratch_operands = 0 : i64, tpu.core_type = #tpu.core_type<tc>, window_params = [{transform_indices = @transform_0, window_bounds = array<i64: 1>}, {transform_indices = @transform_1, window_bounds = array<i64: 1, 2048>}, {transform_indices = @transform_2, window_bounds = array<i64: 1, 2048>}]} {
    %c0 = arith.constant 0 : index
    %0 = memref.load %arg1[%c0] : memref<1xf32, #tpu.memory_space<smem>>
    %c0_0 = arith.constant 0 : index
    %c0_1 = arith.constant 0 : index
    %1 = vector.load %arg2[%c0_0, %c0_1] : memref<1x2048xf32, #tpu.memory_space<vmem>>, vector<1x2048xf32>
    %2 = vector.broadcast %0 : f32 to vector<1x2048xf32>
    %3 = arith.mulf %1, %2 : vector<1x2048xf32>
    %4 = arith.negf %3 : vector<1x2048xf32>
    %5 = math.exp %4 : vector<1x2048xf32>
    %cst = arith.constant 1.000000e+00 : f32
    %6 = vector.broadcast %cst : f32 to vector<1x2048xf32>
    %7 = arith.addf %6, %5 : vector<1x2048xf32>
    %8 = arith.divf %6, %7 : vector<1x2048xf32>
    %9 = arith.mulf %1, %8 : vector<1x2048xf32>
    %cst_2 = arith.constant 0.909090936 : f32
    %10 = vector.broadcast %cst_2 : f32 to vector<1x2048xf32>
    %11 = arith.mulf %9, %10 : vector<1x2048xf32>
    %c0_3 = arith.constant 0 : index
    %c0_4 = arith.constant 0 : index
    %12 = vector.load %arg3[%c0_3, %c0_4] : memref<1x2048xf32, #tpu.memory_space<vmem>>, vector<1x2048xf32>
    tpu.vector_store %arg3[%c0_3, %c0_4], %11 {strides = array<i32>} : memref<1x2048xf32, #tpu.memory_space<vmem>>, vector<1x2048xf32>,
    return
  }
  func.func @transform_0(%arg0: i32) -> i32 {
    %c0_i32 = arith.constant 0 : i32
    %c0_i32_0 = arith.constant 0 : i32
    return %c0_i32 : i32
  }
  func.func @transform_1(%arg0: i32) -> (i32, i32) {
    %c0_i32 = arith.constant 0 : i32
    %c0_i32_0 = arith.constant 0 : i32
    return %arg0, %c0_i32 : i32, i32
  }
  func.func @transform_2(%arg0: i32) -> (i32, i32) {
    %c0_i32 = arith.constant 0 : i32
    %c0_i32_0 = arith.constant 0 : i32
    return %arg0, %c0_i32 : i32, i32
  }
}

</mosaic_0001>

<llo_original>
// kernel: tpu_custom_call.1
$region0: #{tpu_custom_call.1}
  #allocation0 [shape = 'u32[]', space=smem, size = 0x4, offset = 0x4, fixed_abs, tag = 'smem constant byte address 0x4 - core index']
  #allocation1 [shape = 'u32[144,128]{1,0:T(1,128)}', space=vmem, size = 0x12000, scoped, tag = 'internal scratch']
  #allocation2 [shape = 'f32[1]{0:T(128)S(6)}', space=smem, size = 0x200, scoped, tag = 'scoped memory for tpu_custom_call.1']
  %s0 = inlined_call_operand.<no memory space> [shape: f32[1], index: 0, kind: input, shape index: {}]
  %s1 = inlined_call_operand.hbm [shape: f32[1,2048], index: 1, kind: input, shape index: {}, may-alias: {1,2}]
  %s2 = inlined_call_operand.hbm [shape: f32[1,2048], index: 2, kind: output, shape index: {}, may-alias: {1,2}]
  %s3 = sld [smem:[#allocation0]]
  $region22: #{tpu_custom_call.1} parent=0
    _
  %s5 = ssub.s32 1, %s3
  %s6 = scalar_select 0, %s5, %s3
  %7 = sst [smem:[#allocation2]] %s0
  $region1: #{tpu_custom_call.1} parent=0
    #allocation3 [shape = 'u8[8192]{0}', space=vmem, size = 0x2000, scoped, tag = 'input window, operand 1, single buffered']
    #allocation4 [shape = 's32[1]{0}', space=sflag, size = 0x4, scoped, tag = 'scoped memory for tpu_custom_call.1']
    #allocation5 [shape = 's32[1]{0}', space=sflag, size = 0x4, scoped, tag = 'scoped memory for tpu_custom_call.1']
    #allocation6 [shape = 'u8[8192]{0}', space=vmem, size = 0x2000, scoped, tag = 'output window, operand 0, single buffered']
    %8 = vsyncpa [#allocation4], 0
    %9 = vsyncpa [#allocation5], 0
    // Predicated region
    $region2: #{tpu_custom_call.1} parent=1 // pred_check
      _
    $region3: #{tpu_custom_call.1} parent=1 // pred_check_branch
      %11 = sbr.rel (0) target = $region5
    $region4: #{tpu_custom_call.1} parent=1 // pred_region
      _
    $region5: #{tpu_custom_call.1} parent=1 // pred_fallthru
      _
    // Predicated region
    $region6: #{tpu_custom_call.1} parent=1 // pred_check
      _
    $region7: #{tpu_custom_call.1} parent=1 // pred_check_branch
      %13 = sbr.rel (0) target = $region9
    $region8: #{tpu_custom_call.1} parent=1 // pred_region
      %s15 = ssub.s32 256, 256
      %16 = vsyncadd [#allocation4], %s15
      %s18 = sshll.u32 [#allocation3], 4
      %s19 = int_to_ptr.vmem [resolvable:$true] %s18
      %21 = dma.hbm_to_vmem [thread:$0]  %s1, 256, %s19, [#allocation4]
    $region9: #{tpu_custom_call.1} parent=1 // pred_fallthru
      _
    // Predicated region
    $region10: #{tpu_custom_call.1} parent=1 // pred_check
      _
    $region11: #{tpu_custom_call.1} parent=1 // pred_check_branch
      %23 = sbr.rel (0) target = $region13
    $region12: #{tpu_custom_call.1} parent=1 // pred_region
      %24 = dma.done [#allocation4], 256
    $region13: #{tpu_custom_call.1} parent=1 // pred_fallthru
      _
    %s25 = sld [smem:[#allocation2]]
    %v26 = vld [vmem:[#allocation3] sm:$0xff]
    %v27 = vld [vmem:[#allocation3 + $0x8] sm:$0xff]
    %v28 = vstv %s25
    %v29 = vmul.f32 %v26, %v28
    %v30 = vmul.f32 %v27, %v28
    %v31 = vxor.u32 %v29, 2147483648
    %v32 = vxor.u32 %v30, 2147483648
    %v33 = vmul.f32 %v31, 1.442695
    %v34 = vpow.pop %v33
    %v35 = vmul.f32 %v32, 1.442695
    %v36 = vpow.pop %v35
    %v37 = vadd.f32 %v34, 1.0
    %v38 = vadd.f32 %v36, 1.0
    %v39 = vrcp.pop %v37
    %v40 = vmul.f32 1.0, %v39
    %v41 = vrcp.pop %v38
    %v42 = vmul.f32 1.0, %v41
    %v43 = vmul.f32 %v26, %v40
    %v44 = vmul.f32 %v27, %v42
    %v45 = vmul.f32 %v43, 0.90909094
    %v46 = vmul.f32 %v44, 0.90909094
    %47 = vst [vmem:[#allocation6] sm:$0xff] %v45
    %48 = vst [vmem:[#allocation6 + $0x8] sm:$0xff] %v46
    // Predicated region
    $region14: #{tpu_custom_call.1} parent=1 // pred_check
      _
    $region15: #{tpu_custom_call.1} parent=1 // pred_check_branch
      %50 = sbr.rel (0) target = $region17
    $region16: #{tpu_custom_call.1} parent=1 // pred_region
      %s52 = ssub.s32 256, 256
      %53 = vsyncadd [#allocation5], %s52
      %s55 = sshll.u32 [#allocation6], 4
      %s56 = int_to_ptr.vmem [resolvable:$true] %s55
      %58 = dma.vmem_to_hbm [thread:$0]  %s56, 256, %s2, [#allocation5]
    $region17: #{tpu_custom_call.1} parent=1 // pred_fallthru
      _
    // Predicated region
    $region18: #{tpu_custom_call.1} parent=1 // pred_check
      _
    $region19: #{tpu_custom_call.1} parent=1 // pred_check_branch
      %60 = sbr.rel (0) target = $region21
    $region20: #{tpu_custom_call.1} parent=1 // pred_region
      %61 = dma.done [#allocation5], 256
    $region21: #{tpu_custom_call.1} parent=1 // pred_fallthru
      _
    %62 = vsyncpa [#allocation4], 1
    %63 = vsyncpa [#allocation5], 1

</llo_original>
